<compile_context>
chip_gen: v7x
topology: tpu7x:2x2x1
jax: 0.10.0
libtpu: 0.0.40
codegen_flags: <defaults>
</compile_context>

<pallas_src>
import jax
import jax.numpy as jnp
from jax.experimental import pallas as pl
from jax.experimental.pallas import tpu as pltpu


def _round_up(x, m):
    return ((x + m - 1) // m) * m


def _pick_t_blk(seq_len, t_blk_req):
    """Prefer a time-chunk size that divides seq_len (no wasted tail steps)."""
    t_blk_req = max(1, min(int(t_blk_req), seq_len))
    if seq_len % t_blk_req == 0:
        return t_blk_req
    for cand in range(t_blk_req, 0, -1):
        if seq_len % cand == 0 and cand * 2 > t_blk_req:
            return cand
    return t_blk_req  # fall back: pad the time axis (tail steps are discarded)


def _auto_batch_chunks(batch):
    """v7x has 2 TensorCores/chip; split independent batch rows across them."""
    try:
        kind = jax.devices()[0].device_kind.lower()
    except Exception:
        return 1
    if (("v7" in kind) or ("7x" in kind)) and batch >= 16:
        return 2
    return 1


def _rnn_kernel(x_ref, w_ih_ref, bias_ref, h0_ref, w_hh_ref, out_ref, h_scratch):
    """One (batch-chunk, time-chunk) grid step.

    x_ref:     (t_blk, b_blk, in_pad)  compute dtype (bf16 by default)
    w_ih_ref:  (in_pad, h_pad)         compute dtype, resident
    bias_ref:  (1, h_pad)              f32, resident (b_ih + b_hh)
    h0_ref:    (b_blk, h_pad)          f32
    w_hh_ref:  (h_pad, h_pad)          compute dtype, resident
    out_ref:   (t_blk, b_blk, h_pad)   f32
    h_scratch: (b_blk, h_pad)          f32 carry across time chunks
    """
    t_blk, b_blk, in_pad = x_ref.shape
    h_pad = w_hh_ref.shape[-1]

    # Start of a sequence (time-chunk 0 of this batch chunk): load initial h.
    @pl.when(pl.program_id(1) == 0)
    def _():
        h_scratch[...] = h0_ref[...]

    # Time-parallel input projection for the whole chunk (independent of h):
    # one big MXU matmul, f32 accumulation, staged directly into the output.
    x = x_ref[...].reshape(t_blk * b_blk, in_pad)
    xw = jnp.dot(x, w_ih_ref[...], preferred_element_type=jnp.float32)
    out_ref[...] = (xw + bias_ref[...]).reshape(t_blk, b_blk, h_pad)

    w_hh = w_hh_ref[...]            # resident recurrent weight (compute dtype)
    cdt = w_hh.dtype
    h = h_scratch[...]              # f32 carry in vregs

    # Serial recurrence, fully unrolled (static indices, LLO sees the chunk).
    for t in range(t_blk):
        h = jnp.tanh(out_ref[t]
                     + jnp.dot(h.astype(cdt), w_hh,
                               preferred_element_type=jnp.float32))
        out_ref[t] = h
    h_scratch[...] = h              # one store per chunk -> next time chunk


def rnn_forward(inputs, H, w_ih, w_hh, b_ih, b_hh, *,
                t_blk=32, compute_dtype=jnp.bfloat16, batch_chunks=None):
    """Pallas RNN forward matching torch.nn.RNN (single layer, tanh).

    inputs: (seq_len, batch, num_inputs)  -- time-major (batch_first=False)
    H:      (1, batch, num_hiddens) or None
    w_ih:   (num_hiddens, num_inputs)     (PyTorch layout)
    w_hh:   (num_hiddens, num_hiddens)
    b_ih, b_hh: (num_hiddens,)
    compute_dtype: matmul operand dtype (bf16 default; float32 = exact mode)
    Returns (outputs, H_final).
    """
    seq_len, batch, num_inputs = inputs.shape
    num_hiddens = w_ih.shape[0]
    out_dtype = inputs.dtype

    if batch_chunks is None:
        batch_chunks = _auto_batch_chunks(batch)

    t_blk = _pick_t_blk(seq_len, t_blk)
    t_pad = _round_up(seq_len, t_blk)
    b_pad = _round_up(batch, 8 * batch_chunks)   # sublane-aligned per batch chunk
    b_blk = b_pad // batch_chunks
    in_pad = _round_up(num_inputs, 128)          # lane-aligned
    h_pad = _round_up(num_hiddens, 128)

    # ---- Pad operands directly (fused pads; no zeros + update-slice) --------
    # Zero padding is inert: padded W_ih/W_hh/bias columns are 0 -> padded
    # hidden columns stay exactly 0 through tanh(0)=0; padded batch rows and
    # padded tail time steps never feed real outputs and are sliced away.
    x_p = jnp.pad(inputs.astype(compute_dtype),
                  ((0, t_pad - seq_len), (0, b_pad - batch),
                   (0, in_pad - num_inputs)))
    w_ih_p = jnp.pad(w_ih.T.astype(compute_dtype),
                     ((0, in_pad - num_inputs), (0, h_pad - num_hiddens)))
    w_hh_p = jnp.pad(w_hh.T.astype(compute_dtype),
                     ((0, h_pad - num_hiddens), (0, h_pad - num_hiddens)))
    bias_p = jnp.pad((b_ih + b_hh).astype(jnp.float32),
                     (0, h_pad - num_hiddens)).reshape(1, h_pad)
    if H is None:
        h0_p = jnp.zeros((b_pad, h_pad), jnp.float32)
    else:
        h0_p = jnp.pad(H[0].astype(jnp.float32),
                       ((0, b_pad - batch), (0, h_pad - num_hiddens)))

    grid = (batch_chunks, t_pad // t_blk)        # (parallel, sequential-time)

    # ---- VMEM budget: weights resident + double-buffered x/out chunks -------
    cd_bytes = jnp.dtype(compute_dtype).itemsize
    vmem_needed = (2 * t_blk * b_blk * in_pad * cd_bytes     # x slabs (2-buf)
                   + 2 * t_blk * b_blk * h_pad * 4           # out slabs (2-buf)
                   + 2 * in_pad * h_pad * cd_bytes           # w_ih
                   + 2 * h_pad * h_pad * cd_bytes            # w_hh
                   + 2 * (h_pad + b_blk * h_pad) * 4         # bias + h0
                   + b_blk * h_pad * 4)                      # h carry scratch
    vmem_limit = min(max(int(vmem_needed * 1.5) + (2 << 20), 16 << 20), 64 << 20)

    out_p = pl.pallas_call(
        _rnn_kernel,
        out_shape=jax.ShapeDtypeStruct((t_pad, b_pad, h_pad), jnp.float32),
        grid_spec=pltpu.PrefetchScalarGridSpec(
            num_scalar_prefetch=0,
            grid=grid,
            in_specs=[
                # raw input chunk for the fused projection
                pl.BlockSpec((t_blk, b_blk, in_pad), lambda b, c: (c, b, 0)),
                # resident weights / bias (constant index_map -> fetched once)
                pl.BlockSpec((in_pad, h_pad), lambda b, c: (0, 0)),
                pl.BlockSpec((1, h_pad), lambda b, c: (0, 0)),
                pl.BlockSpec((b_blk, h_pad), lambda b, c: (b, 0)),
                pl.BlockSpec((h_pad, h_pad), lambda b, c: (0, 0)),
            ],
            out_specs=pl.BlockSpec((t_blk, b_blk, h_pad), lambda b, c: (c, b, 0)),
            scratch_shapes=[pltpu.VMEM((b_blk, h_pad), jnp.float32)],
        ),
        compiler_params=pltpu.CompilerParams(
            dimension_semantics=("parallel", "arbitrary"),
            vmem_limit_bytes=vmem_limit),
    )(x_p, w_ih_p, bias_p, h0_p, w_hh_p)

    outputs = out_p[:seq_len, :batch, :num_hiddens].astype(out_dtype)
    h_final = outputs[seq_len - 1][None]
    return outputs, h_final


def _rnn_reference(inputs, H, w_ih, w_hh, b_ih, b_hh):
    """Pure-JAX f32 reference identical to torch.nn.RNN forward."""
    batch = inputs.shape[1]
    num_hiddens = w_ih.shape[0]
    h = jnp.zeros((batch, num_hiddens), inputs.dtype) if H is None else H[0]

    def step(h, x):
        h_new = jnp.tanh(x @ w_ih.T + b_ih + h @ w_hh.T + b_hh)
        return h_new, h_new

    h_last, ys = jax.lax.scan(step, h, inputs)
    return ys, h_last[None]


if __name__ == "__main__":
    key = jax.random.PRNGKey(0)
    k_x, k_h, k_wi, k_wh, k_bi, k_bh, k_x2, k_h2 = jax.random.split(key, 8)

    # Small shapes consistent with the module's forward.
    seq_len, batch = 8, 4
    num_inputs, num_hiddens = 32, 32

    bound = 1.0 / (num_hiddens ** 0.5)   # PyTorch U(-1/sqrt(H), 1/sqrt(H)) init
    w_ih = jax.random.uniform(k_wi, (num_hiddens, num_inputs), jnp.float32, -bound, bound)
    w_hh = jax.random.uniform(k_wh, (num_hiddens, num_hiddens), jnp.float32, -bound, bound)
    b_ih = jax.random.uniform(k_bi, (num_hiddens,), jnp.float32, -bound, bound)
    b_hh = jax.random.uniform(k_bh, (num_hiddens,), jnp.float32, -bound, bound)

    inputs = jax.random.normal(k_x, (seq_len, batch, num_inputs), jnp.float32)
    H0 = jax.random.normal(k_h, (1, batch, num_hiddens), jnp.float32)

    ref_out, ref_h = _rnn_reference(inputs, H0, w_ih, w_hh, b_ih, b_hh)
    ref_out0, ref_h0 = _rnn_reference(inputs, None, w_ih, w_hh, b_ih, b_hh)

    # Exact f32 mode: multi-chunk, single-chunk, and H=None paths.
    out_a, h_a = rnn_forward(inputs, H0, w_ih, w_hh, b_ih, b_hh,
                             t_blk=4, compute_dtype=jnp.float32)
    out_b, h_b = rnn_forward(inputs, H0, w_ih, w_hh, b_ih, b_hh,
                             t_blk=8, compute_dtype=jnp.float32)
    out_c, h_c = rnn_forward(inputs, None, w_ih, w_hh, b_ih, b_hh,
                             compute_dtype=jnp.float32)
    # Default fast (bf16-operand) mode.
    out_d, h_d = rnn_forward(inputs, H0, w_ih, w_hh, b_ih, b_hh)
    jax.block_until_ready((out_a, h_a, out_b, h_b, out_c, h_c, out_d, h_d))

    assert out_a.shape == (seq_len, batch, num_hiddens)
    assert h_a.shape == (1, batch, num_hiddens)
    assert jnp.allclose(out_a, ref_out, atol=1e-5, rtol=1e-5)
    assert jnp.allclose(h_a, ref_h, atol=1e-5, rtol=1e-5)
    assert jnp.allclose(out_b, ref_out, atol=1e-5, rtol=1e-5)
    assert jnp.allclose(h_b, ref_h, atol=1e-5, rtol=1e-5)
    assert jnp.allclose(out_c, ref_out0, atol=1e-5, rtol=1e-5)
    assert jnp.allclose(h_c, ref_h0, atol=1e-5, rtol=1e-5)
    assert jnp.allclose(out_d, ref_out, atol=2e-2, rtol=2e-2)
    assert jnp.allclose(h_d, ref_h, atol=2e-2, rtol=2e-2)

    # Ragged shapes: exercises time/batch/lane padding and the padded time tail.
    sl2, b2, ni2, nh2 = 7, 3, 20, 24
    bound2 = 1.0 / (nh2 ** 0.5)
    kk = jax.random.split(k_x2, 4)
    w_ih2 = jax.random.uniform(kk[0], (nh2, ni2), jnp.float32, -bound2, bound2)
    w_hh2 = jax.random.uniform(kk[1], (nh2, nh2), jnp.float32, -bound2, bound2)
    b_ih2 = jax.random.uniform(kk[2], (nh2,), jnp.float32, -bound2, bound2)
    b_hh2 = jax.random.uniform(kk[3], (nh2,), jnp.float32, -bound2, bound2)
    x2 = jax.random.normal(k_h2, (sl2, b2, ni2), jnp.float32)
    ref_out2, ref_h2 = _rnn_reference(x2, None, w_ih2, w_hh2, b_ih2, b_hh2)
    out_e, h_e = rnn_forward(x2, None, w_ih2, w_hh2, b_ih2, b_hh2,
                             t_blk=4, compute_dtype=jnp.float32)
    jax.block_until_ready((out_e, h_e))
    assert jnp.allclose(out_e, ref_out2, atol=1e-5, rtol=1e-5)
    assert jnp.allclose(h_e, ref_h2, atol=1e-5, rtol=1e-5)

    print("KERNEL_OK")
</pallas_src>

<mosaic_0001>
module attributes {stable_mosaic.version = 11 : i64} {
  func.func @_rnn_kernel(%arg0: i32, %arg1: i32, %arg2: memref<4x8x128xf32, #tpu.memory_space<vmem>>, %arg3: memref<128x128xf32, #tpu.memory_space<vmem>>, %arg4: memref<1x128xf32, #tpu.memory_space<vmem>>, %arg5: memref<8x128xf32, #tpu.memory_space<vmem>>, %arg6: memref<128x128xf32, #tpu.memory_space<vmem>>, %arg7: memref<4x8x128xf32, #tpu.memory_space<vmem>>, %arg8: memref<8x128xf32, #tpu.memory_space<vmem>>) attributes {dimension_semantics = [#tpu.dimension_semantics<parallel>, #tpu.dimension_semantics<arbitrary>], iteration_bounds = array<i64: 1, 2>, scalar_prefetch = 0 : i64, scratch_operands = 1 : i64, tpu.core_type = #tpu.core_type<tc>, window_params = [{transform_indices = @transform_0, window_bounds = array<i64: 4, 8, 128>}, {pipeline_mode = #tpu.pipeline_mode<synchronous>, transform_indices = @transform_1, window_bounds = array<i64: 128, 128>}, {pipeline_mode = #tpu.pipeline_mode<synchronous>, transform_indices = @transform_2, window_bounds = array<i64: 1, 128>}, {transform_indices = @transform_3, window_bounds = array<i64: 8, 128>}, {pipeline_mode = #tpu.pipeline_mode<synchronous>, transform_indices = @transform_4, window_bounds = array<i64: 128, 128>}, {transform_indices = @transform_5, window_bounds = array<i64: 4, 8, 128>}]} {
    %c0_i32 = arith.constant 0 : i32
    %0 = arith.cmpi eq, %arg1, %c0_i32 : i32
    %1 = arith.extui %0 : i1 to i32
    %c0_i32_0 = arith.constant 0 : i32
    %2 = arith.cmpi ne, %1, %c0_i32_0 : i32
    scf.if %2 {
      %c0_41 = arith.constant 0 : index
      %c0_42 = arith.constant 0 : index
      %47 = vector.load %arg5[%c0_41, %c0_42] : memref<8x128xf32, #tpu.memory_space<vmem>>, vector<8x128xf32>
      %c0_43 = arith.constant 0 : index
      %c0_44 = arith.constant 0 : index
      %48 = vector.load %arg8[%c0_43, %c0_44] : memref<8x128xf32, #tpu.memory_space<vmem>>, vector<8x128xf32>
      tpu.vector_store %arg8[%c0_43, %c0_44], %47 {strides = array<i32>} : memref<8x128xf32, #tpu.memory_space<vmem>>, vector<8x128xf32>,
    } else {
    }
    %c0 = arith.constant 0 : index
    %c0_1 = arith.constant 0 : index
    %c0_2 = arith.constant 0 : index
    %3 = vector.load %arg2[%c0, %c0_1, %c0_2] : memref<4x8x128xf32, #tpu.memory_space<vmem>>, vector<4x8x128xf32>
    %4 = vector.shape_cast %3 : vector<4x8x128xf32> to vector<32x128xf32>
    %c0_3 = arith.constant 0 : index
    %c0_4 = arith.constant 0 : index
    %5 = vector.load %arg3[%c0_3, %c0_4] : memref<128x128xf32, #tpu.memory_space<vmem>>, vector<128x128xf32>
    %cst = arith.constant dense<0.000000e+00> : vector<32x128xf32>
    %6 = tpu.matmul %4, %5, %cst {dimension_numbers = #tpu.dot_dimension_numbers<[1], [0], [0], [1], [0, 0, 1, 1], [], []>} : vector<32x128xf32>, vector<128x128xf32>, vector<32x128xf32> -> vector<32x128xf32>
    %c0_5 = arith.constant 0 : index
    %c0_6 = arith.constant 0 : index
    %7 = vector.load %arg4[%c0_5, %c0_6] : memref<1x128xf32, #tpu.memory_space<vmem>>, vector<1x128xf32>
    %8 = vector.broadcast %7 : vector<1x128xf32> to vector<32x128xf32>
    %9 = arith.addf %6, %8 : vector<32x128xf32>
    %10 = vector.shape_cast %9 : vector<32x128xf32> to vector<4x8x128xf32>
    %c0_7 = arith.constant 0 : index
    %c0_8 = arith.constant 0 : index
    %c0_9 = arith.constant 0 : index
    %11 = vector.load %arg7[%c0_7, %c0_8, %c0_9] : memref<4x8x128xf32, #tpu.memory_space<vmem>>, vector<4x8x128xf32>
    tpu.vector_store %arg7[%c0_7, %c0_8, %c0_9], %10 {strides = array<i32>} : memref<4x8x128xf32, #tpu.memory_space<vmem>>, vector<4x8x128xf32>,
    %c0_10 = arith.constant 0 : index
    %c0_11 = arith.constant 0 : index
    %12 = vector.load %arg6[%c0_10, %c0_11] : memref<128x128xf32, #tpu.memory_space<vmem>>, vector<128x128xf32>
    %c0_12 = arith.constant 0 : index
    %c0_13 = arith.constant 0 : index
    %13 = vector.load %arg8[%c0_12, %c0_13] : memref<8x128xf32, #tpu.memory_space<vmem>>, vector<8x128xf32>
    %c0_14 = arith.constant 0 : index
    %c0_15 = arith.constant 0 : index
    %c0_16 = arith.constant 0 : index
    %14 = vector.load %arg7[%c0_14, %c0_15, %c0_16] : memref<4x8x128xf32, #tpu.memory_space<vmem>>, vector<1x8x128xf32>
    %15 = vector.shape_cast %14 : vector<1x8x128xf32> to vector<8x128xf32>
    %cst_17 = arith.constant dense<0.000000e+00> : vector<8x128xf32>
    %16 = tpu.matmul %13, %12, %cst_17 {dimension_numbers = #tpu.dot_dimension_numbers<[1], [0], [0], [1], [0, 0, 1, 1], [], []>} : vector<8x128xf32>, vector<128x128xf32>, vector<8x128xf32> -> vector<8x128xf32>
    %17 = arith.addf %15, %16 : vector<8x128xf32>
    %18 = math.tanh %17 : vector<8x128xf32>
    %c0_18 = arith.constant 0 : index
    %c0_19 = arith.constant 0 : index
    %c0_20 = arith.constant 0 : index
    %19 = vector.load %arg7[%c0_18, %c0_19, %c0_20] : memref<4x8x128xf32, #tpu.memory_space<vmem>>, vector<1x8x128xf32>
    %20 = vector.shape_cast %19 : vector<1x8x128xf32> to vector<8x128xf32>
    %21 = vector.shape_cast %18 : vector<8x128xf32> to vector<1x8x128xf32>
    tpu.vector_store %arg7[%c0_18, %c0_19, %c0_20], %21 {strides = array<i32>} : memref<4x8x128xf32, #tpu.memory_space<vmem>>, vector<1x8x128xf32>,
    %c1 = arith.constant 1 : index
    %c0_21 = arith.constant 0 : index
    %c0_22 = arith.constant 0 : index
    %22 = vector.load %arg7[%c1, %c0_21, %c0_22] : memref<4x8x128xf32, #tpu.memory_space<vmem>>, vector<1x8x128xf32>
    %23 = vector.shape_cast %22 : vector<1x8x128xf32> to vector<8x128xf32>
    %cst_23 = arith.constant dense<0.000000e+00> : vector<8x128xf32>
    %24 = tpu.matmul %18, %12, %cst_23 {dimension_numbers = #tpu.dot_dimension_numbers<[1], [0], [0], [1], [0, 0, 1, 1], [], []>} : vector<8x128xf32>, vector<128x128xf32>, vector<8x128xf32> -> vector<8x128xf32>
    %25 = arith.addf %23, %24 : vector<8x128xf32>
    %26 = math.tanh %25 : vector<8x128xf32>
    %c1_24 = arith.constant 1 : index
    %c0_25 = arith.constant 0 : index
    %c0_26 = arith.constant 0 : index
    %27 = vector.load %arg7[%c1_24, %c0_25, %c0_26] : memref<4x8x128xf32, #tpu.memory_space<vmem>>, vector<1x8x128xf32>
    %28 = vector.shape_cast %27 : vector<1x8x128xf32> to vector<8x128xf32>
    %29 = vector.shape_cast %26 : vector<8x128xf32> to vector<1x8x128xf32>
    tpu.vector_store %arg7[%c1_24, %c0_25, %c0_26], %29 {strides = array<i32>} : memref<4x8x128xf32, #tpu.memory_space<vmem>>, vector<1x8x128xf32>,
    %c2 = arith.constant 2 : index
    %c0_27 = arith.constant 0 : index
    %c0_28 = arith.constant 0 : index
    %30 = vector.load %arg7[%c2, %c0_27, %c0_28] : memref<4x8x128xf32, #tpu.memory_space<vmem>>, vector<1x8x128xf32>
    %31 = vector.shape_cast %30 : vector<1x8x128xf32> to vector<8x128xf32>
    %cst_29 = arith.constant dense<0.000000e+00> : vector<8x128xf32>
    %32 = tpu.matmul %26, %12, %cst_29 {dimension_numbers = #tpu.dot_dimension_numbers<[1], [0], [0], [1], [0, 0, 1, 1], [], []>} : vector<8x128xf32>, vector<128x128xf32>, vector<8x128xf32> -> vector<8x128xf32>
    %33 = arith.addf %31, %32 : vector<8x128xf32>
    %34 = math.tanh %33 : vector<8x128xf32>
    %c2_30 = arith.constant 2 : index
    %c0_31 = arith.constant 0 : index
    %c0_32 = arith.constant 0 : index
    %35 = vector.load %arg7[%c2_30, %c0_31, %c0_32] : memref<4x8x128xf32, #tpu.memory_space<vmem>>, vector<1x8x128xf32>
    %36 = vector.shape_cast %35 : vector<1x8x128xf32> to vector<8x128xf32>
    %37 = vector.shape_cast %34 : vector<8x128xf32> to vector<1x8x128xf32>
    tpu.vector_store %arg7[%c2_30, %c0_31, %c0_32], %37 {strides = array<i32>} : memref<4x8x128xf32, #tpu.memory_space<vmem>>, vector<1x8x128xf32>,
    %c3 = arith.constant 3 : index
    %c0_33 = arith.constant 0 : index
    %c0_34 = arith.constant 0 : index
    %38 = vector.load %arg7[%c3, %c0_33, %c0_34] : memref<4x8x128xf32, #tpu.memory_space<vmem>>, vector<1x8x128xf32>
    %39 = vector.shape_cast %38 : vector<1x8x128xf32> to vector<8x128xf32>
    %cst_35 = arith.constant dense<0.000000e+00> : vector<8x128xf32>
    %40 = tpu.matmul %34, %12, %cst_35 {dimension_numbers = #tpu.dot_dimension_numbers<[1], [0], [0], [1], [0, 0, 1, 1], [], []>} : vector<8x128xf32>, vector<128x128xf32>, vector<8x128xf32> -> vector<8x128xf32>
    %41 = arith.addf %39, %40 : vector<8x128xf32>
    %42 = math.tanh %41 : vector<8x128xf32>
    %c3_36 = arith.constant 3 : index
    %c0_37 = arith.constant 0 : index
    %c0_38 = arith.constant 0 : index
    %43 = vector.load %arg7[%c3_36, %c0_37, %c0_38] : memref<4x8x128xf32, #tpu.memory_space<vmem>>, vector<1x8x128xf32>
    %44 = vector.shape_cast %43 : vector<1x8x128xf32> to vector<8x128xf32>
    %45 = vector.shape_cast %42 : vector<8x128xf32> to vector<1x8x128xf32>
    tpu.vector_store %arg7[%c3_36, %c0_37, %c0_38], %45 {strides = array<i32>} : memref<4x8x128xf32, #tpu.memory_space<vmem>>, vector<1x8x128xf32>,
    %c0_39 = arith.constant 0 : index
    %c0_40 = arith.constant 0 : index
    %46 = vector.load %arg8[%c0_39, %c0_40] : memref<8x128xf32, #tpu.memory_space<vmem>>, vector<8x128xf32>
    tpu.vector_store %arg8[%c0_39, %c0_40], %42 {strides = array<i32>} : memref<8x128xf32, #tpu.memory_space<vmem>>, vector<8x128xf32>,
    return
  }
  func.func @transform_0(%arg0: i32, %arg1: i32) -> (i32, i32, i32) {
    %c0_i32 = arith.constant 0 : i32
    %c0_i32_0 = arith.constant 0 : i32
    return %arg1, %arg0, %c0_i32 : i32, i32, i32
  }
  func.func @transform_1(%arg0: i32, %arg1: i32) -> (i32, i32) {
    %c0_i32 = arith.constant 0 : i32
    %c0_i32_0 = arith.constant 0 : i32
    %c0_i32_1 = arith.constant 0 : i32
    return %c0_i32, %c0_i32_0 : i32, i32
  }
  func.func @transform_2(%arg0: i32, %arg1: i32) -> (i32, i32) {
    %c0_i32 = arith.constant 0 : i32
    %c0_i32_0 = arith.constant 0 : i32
    %c0_i32_1 = arith.constant 0 : i32
    return %c0_i32, %c0_i32_0 : i32, i32
  }
  func.func @transform_3(%arg0: i32, %arg1: i32) -> (i32, i32) {
    %c0_i32 = arith.constant 0 : i32
    %c0_i32_0 = arith.constant 0 : i32
    return %arg0, %c0_i32 : i32, i32
  }
  func.func @transform_4(%arg0: i32, %arg1: i32) -> (i32, i32) {
    %c0_i32 = arith.constant 0 : i32
    %c0_i32_0 = arith.constant 0 : i32
    %c0_i32_1 = arith.constant 0 : i32
    return %c0_i32, %c0_i32_0 : i32, i32
  }
  func.func @transform_5(%arg0: i32, %arg1: i32) -> (i32, i32, i32) {
    %c0_i32 = arith.constant 0 : i32
    %c0_i32_0 = arith.constant 0 : i32
    return %arg1, %arg0, %c0_i32 : i32, i32, i32
  }
}

</mosaic_0001>

<llo_original>
// kernel: tpu_custom_call.1
$region0: #{tpu_custom_call.1}
  #allocation0 [shape = 'u32[]', space=smem, size = 0x4, offset = 0x4, fixed_abs, tag = 'smem constant byte address 0x4 - core index']
  #allocation1 [shape = 'u32[144,128]{1,0:T(1,128)}', space=vmem, size = 0x12000, scoped, tag = 'internal scratch']
  #allocation2 [shape = 'f32[8,128]{1,0:T(8,128)}', space=vmem, size = 0x1000, scoped, tag = 'scratch operand']
  %s0 = inlined_call_operand.hbm [shape: f32[8,8,128], index: 0, kind: input, shape index: {}]
  %s1 = inlined_call_operand.hbm [shape: f32[128,128], index: 1, kind: input, shape index: {}]
  %s2 = inlined_call_operand.vmem [shape: f32[1,128], index: 2, kind: input, shape index: {}]
  %s3 = inlined_call_operand.vmem [shape: f32[8,128], index: 3, kind: input, shape index: {}]
  %s4 = inlined_call_operand.hbm [shape: f32[128,128], index: 4, kind: input, shape index: {}]
  %s5 = inlined_call_operand.hbm [shape: f32[8,8,128], index: 5, kind: output, shape index: {}]
  %s6 = sld [smem:[#allocation0]]
  $region69: #{tpu_custom_call.1} parent=0
    _
  %s8 = ssub.s32 1, %s6
  %s9 = scalar_select 0, %s8, %s6
  $region1: #{tpu_custom_call.1} parent=0
    #allocation3 [shape = 'u8[32768]{0}', space=vmem, size = 0x8000, scoped, tag = 'input window, operand 0']
    #allocation4 [shape = 's32[2]{0}', space=sflag, size = 0x8, scoped, tag = 'scoped memory for tpu_custom_call.1']
    #allocation5 [shape = 's32[2]{0}', space=sflag, size = 0x8, scoped, tag = 'scoped memory for tpu_custom_call.1']
    #allocation6 [shape = 'u8[65536]{0}', space=vmem, size = 0x10000, scoped, tag = 'input window, operand 1, single buffered']
    #allocation7 [shape = 's32[1]{0}', space=sflag, size = 0x4, scoped, tag = 'scoped memory for tpu_custom_call.1']
    #allocation8 [shape = 'u8[65536]{0}', space=vmem, size = 0x10000, scoped, tag = 'input window, operand 4, single buffered']
    #allocation9 [shape = 'u8[32768]{0}', space=vmem, size = 0x8000, scoped, tag = 'output window, operand 0']
    %10 = vsyncpa [#allocation4], 0
    %s11 = scalar_lea.sflag [#allocation4], 1
    %12 = vsyncpa %s11, 0
    %13 = vsyncpa [#allocation7], 0
    %14 = vsyncpa [#allocation5], 0
    %s15 = scalar_lea.sflag [#allocation5], 1
    %16 = vsyncpa %s15, 0
    loop: start=0, step=1, limit=4
    $region2: #{tpu_custom_call.1} parent=1 // loop_pre_header
      _
    $region3: #{tpu_custom_call.1} parent=1 // loop_header
      %s18 = sphi 0, %s22
      %p19 = scmp.ge.s32.totalorder %s18, 4
      %s25 = sphi 0, %s37
      %s26 = sphi 0, %s33
      %s27 = sphi 0, %s25
      %s28 = sphi 0, %s26
      %s29 = sphi 0, %s27
      %s30 = sphi 0, %s28
      %s42 = sphi 0, %s44
      %s45 = sphi 0, %s42
      %s46 = sphi 0, %s45
      %s62 = sphi 0, %s46
      %s66 = sphi 0, %s66
      %s68 = sphi 0, %s66
      %s69 = sphi 0, %s68
      %s83 = sphi 0, %s69
      %s87 = sphi 0, %s87
      %s89 = sphi 0, %s87
      %s90 = sphi 0, %s89
      %s104 = sphi 0, %s90
      %s110 = sphi 0, %s112
      %s113 = sphi 0, %s110
      %s114 = sphi 0, %s113
      %s130 = sphi 0, %s114
      %s134 = sphi 0, %s134
      %s136 = sphi 0, %s134
      %s137 = sphi 0, %s136
      %s151 = sphi 0, %s137
      %s159 = sphi 0, %s161
      %s162 = sphi 0, %s159
      %s163 = sphi 0, %s162
      %s179 = sphi 0, %s163
    $region4: #{tpu_custom_call.1} parent=1 // loop_header_branch
      %21 = sbr.rel (%p19) target = $region8
    $region5: #{tpu_custom_call.1} parent=1 // loop_body
      %s23 = ssub.s32 %s18, 1
      %s24 = ssub.s32 %s18, 2
      %s31 = sadd.s32 1, %s26
      %p32 = scmp.ge.s32.totalorder %s31, 2
      %s33 = scalar_select %p32, 0, %s31
      %s34 = sadd.s32 1, %s25
      %s35 = scalar_select %p32, %s34, %s25
      %p36 = scmp.ge.s32.totalorder %s35, 1
      %s37 = scalar_select %p36, 0, %s35
      %s38 = ssub.s32 %s26, %s33
      %s39 = ssub.s32 %s25, %s37
      %s40 = sor.u32 %s38, %s39
      %p41 = scmp.eq.s32.totalorder %s40, 0
      %s43 = sadd.s32 %s42, 1
      %s44 = scalar_select %p41, %s42, %s43
      %p47 = pneg %p41
      %p48 = scmp.eq.s32.totalorder %s18, 1
      %p49 = por %p47, %p48
      %p50 = scmp.ne.s32.totalorder %s42, %s45
      %p51 = scmp.eq.s32.totalorder %s18, 0
      %p52 = por %p50, %p51
      %p53 = scmp.ne.s32.totalorder %s42, %s45
      %p54 = scmp.eq.s32.totalorder %s23, 1
      %p55 = por %p53, %p54
      %p56 = scmp.ne.s32.totalorder %s45, %s46
      %p57 = scmp.eq.s32.totalorder %s23, 0
      %p58 = por %p56, %p57
      %p59 = scmp.ne.s32.totalorder %s45, %s46
      %p60 = scmp.eq.s32.totalorder %s24, 1
      %p61 = por %p59, %p60
      %p63 = scmp.ne.s32.totalorder %s46, %s62
      %p64 = scmp.eq.s32.totalorder %s24, 0
      %p65 = por %p63, %p64
      %s67 = sadd.s32 %s66, 1
      %p70 = scmp.eq.s32.totalorder %s18, 1
      %p71 = scmp.ne.s32.totalorder %s66, %s68
      %p72 = scmp.eq.s32.totalorder %s18, 0
      %p73 = por %p71, %p72
      %p74 = scmp.ne.s32.totalorder %s66, %s68
      %p75 = scmp.eq.s32.totalorder %s23, 1
      %p76 = por %p74, %p75
      %p77 = scmp.ne.s32.totalorder %s68, %s69
      %p78 = scmp.eq.s32.totalorder %s23, 0
      %p79 = por %p77, %p78
      %p80 = scmp.ne.s32.totalorder %s68, %s69
      %p81 = scmp.eq.s32.totalorder %s24, 1
      %p82 = por %p80, %p81
      %p84 = scmp.ne.s32.totalorder %s69, %s83
      %p85 = scmp.eq.s32.totalorder %s24, 0
      %p86 = por %p84, %p85
      %s88 = sadd.s32 %s87, 1
      %p91 = scmp.eq.s32.totalorder %s18, 1
      %p92 = scmp.ne.s32.totalorder %s87, %s89
      %p93 = scmp.eq.s32.totalorder %s18, 0
      %p94 = por %p92, %p93
      %p95 = scmp.ne.s32.totalorder %s87, %s89
      %p96 = scmp.eq.s32.totalorder %s23, 1
      %p97 = por %p95, %p96
      %p98 = scmp.ne.s32.totalorder %s89, %s90
      %p99 = scmp.eq.s32.totalorder %s23, 0
      %p100 = por %p98, %p99
      %p101 = scmp.ne.s32.totalorder %s89, %s90
      %p102 = scmp.eq.s32.totalorder %s24, 1
      %p103 = por %p101, %p102
      %p105 = scmp.ne.s32.totalorder %s90, %s104
      %p106 = scmp.eq.s32.totalorder %s24, 0
      %p107 = por %p105, %p106
      %s108 = ssub.s32 %s25, %s37
      %p109 = scmp.eq.s32.totalorder %s108, 0
      %s111 = sadd.s32 %s110, 1
      %s112 = scalar_select %p109, %s110, %s111
      %p115 = pneg %p109
      %p116 = scmp.eq.s32.totalorder %s18, 1
      %p117 = por %p115, %p116
      %p118 = scmp.ne.s32.totalorder %s110, %s113
      %p119 = scmp.eq.s32.totalorder %s18, 0
      %p120 = por %p118, %p119
      %p121 = scmp.ne.s32.totalorder %s110, %s113
      %p122 = scmp.eq.s32.totalorder %s23, 1
      %p123 = por %p121, %p122
      %p124 = scmp.ne.s32.totalorder %s113, %s114
      %p125 = scmp.eq.s32.totalorder %s23, 0
      %p126 = por %p124, %p125
      %p127 = scmp.ne.s32.totalorder %s113, %s114
      %p128 = scmp.eq.s32.totalorder %s24, 1
      %p129 = por %p127, %p128
      %p131 = scmp.ne.s32.totalorder %s114, %s130
      %p132 = scmp.eq.s32.totalorder %s24, 0
      %p133 = por %p131, %p132
      %s135 = sadd.s32 %s134, 1
      %p138 = scmp.eq.s32.totalorder %s18, 1
      %p139 = scmp.ne.s32.totalorder %s134, %s136
      %p140 = scmp.eq.s32.totalorder %s18, 0
      %p141 = por %p139, %p140
      %p142 = scmp.ne.s32.totalorder %s134, %s136
      %p143 = scmp.eq.s32.totalorder %s23, 1
      %p144 = por %p142, %p143
      %p145 = scmp.ne.s32.totalorder %s136, %s137
      %p146 = scmp.eq.s32.totalorder %s23, 0
      %p147 = por %p145, %p146
      %p148 = scmp.ne.s32.totalorder %s136, %s137
      %p149 = scmp.eq.s32.totalorder %s24, 1
      %p150 = por %p148, %p149
      %p152 = scmp.ne.s32.totalorder %s137, %s151
      %p153 = scmp.eq.s32.totalorder %s24, 0
      %p154 = por %p152, %p153
      %s155 = ssub.s32 %s26, %s33
      %s156 = ssub.s32 %s25, %s37
      %s157 = sor.u32 %s155, %s156
      %p158 = scmp.eq.s32.totalorder %s157, 0
      %s160 = sadd.s32 %s159, 1
      %s161 = scalar_select %p158, %s159, %s160
      %p164 = pneg %p158
      %p165 = scmp.eq.s32.totalorder %s18, 1
      %p166 = por %p164, %p165
      %p167 = scmp.ne.s32.totalorder %s159, %s162
      %p168 = scmp.eq.s32.totalorder %s18, 0
      %p169 = por %p167, %p168
      %p170 = scmp.ne.s32.totalorder %s159, %s162
      %p171 = scmp.eq.s32.totalorder %s23, 1
      %p172 = por %p170, %p171
      %p173 = scmp.ne.s32.totalorder %s162, %s163
      %p174 = scmp.eq.s32.totalorder %s23, 0
      %p175 = por %p173, %p174
      %p176 = scmp.ne.s32.totalorder %s162, %s163
      %p177 = scmp.eq.s32.totalorder %s24, 1
      %p178 = por %p176, %p177
      %p180 = scmp.ne.s32.totalorder %s163, %s179
      %p181 = scmp.eq.s32.totalorder %s24, 0
      %p182 = por %p180, %p181
      %p183 = scmp.le.s32.totalorder 1, %s18
      %p184 = scmp.lt.s32.totalorder %s18, 3
      %p185 = pnand %p183, %p184
      %p186 = pneg %p185
      // Predicated region
      $region9: #{tpu_custom_call.1} parent=5 // pred_check
        _
      $region10: #{tpu_custom_call.1} parent=5 // pred_check_branch
        %188 = sbr.rel (%p185) target = $region12
      $region11: #{tpu_custom_call.1} parent=5 // pred_region
        %s189 = ssub.s32 %s18, 1
        // Predicated region
        $region13: #{tpu_custom_call.1} parent=11 // pred_check
          %p190 = pneg %p79
        $region14: #{tpu_custom_call.1} parent=11 // pred_check_branch
          %192 = sbr.rel (%p190) target = $region16
        $region15: #{tpu_custom_call.1} parent=11 // pred_region
          %s194 = ssub.s32 2048, 2048
          %195 = vsyncadd [#allocation7], %s194
          %s196 = sshll.u32 [#allocation6], 4
          %s197 = int_to_ptr.vmem [resolvable:$true] %s196
          %202 = dma.hbm_to_vmem [thread:$0]  %s1, 2048, %s197, [#allocation7], 128, 128, 8
        $region16: #{tpu_custom_call.1} parent=11 // pred_fallthru
          _
        // Predicated region
        $region17: #{tpu_custom_call.1} parent=11 // pred_check
          %p203 = pneg %p100
        $region18: #{tpu_custom_call.1} parent=11 // pred_check_branch
          %205 = sbr.rel (%p203) target = $region20
        $region19: #{tpu_custom_call.1} parent=11 // pred_region
          _
        $region20: #{tpu_custom_call.1} parent=11 // pred_fallthru
          _
        // Predicated region
        $region21: #{tpu_custom_call.1} parent=11 // pred_check
          %p206 = pneg %p126
        $region22: #{tpu_custom_call.1} parent=11 // pred_check_branch
          %208 = sbr.rel (%p206) target = $region24
        $region23: #{tpu_custom_call.1} parent=11 // pred_region
          %p209 = scmp.lt.s32.totalorder %s27, 0
          %s210 = scalar_select %p209, %s27, 0
          %s211 = smul.addr %s210, 8
          %s212 = scalar_lea.vmem %s3, %s211
        $region24: #{tpu_custom_call.1} parent=11 // pred_fallthru
          _
        // Predicated region
        $region25: #{tpu_custom_call.1} parent=11 // pred_check
          %p213 = pneg %p147
        $region26: #{tpu_custom_call.1} parent=11 // pred_check_branch
          %215 = sbr.rel (%p213) target = $region28
        $region27: #{tpu_custom_call.1} parent=11 // pred_region
          %s217 = ssub.s32 2048, 2048
          %218 = vsyncadd [#allocation7], %s217
          %s219 = sshll.u32 [#allocation8], 4
          %s220 = int_to_ptr.vmem [resolvable:$true] %s219
          %225 = dma.hbm_to_vmem [thread:$0]  %s4, 2048, %s220, [#allocation7], 128, 128, 8
        $region28: #{tpu_custom_call.1} parent=11 // pred_fallthru
          _
      $region12: #{tpu_custom_call.1} parent=5 // pred_fallthru
        _
      %p226 = scmp.lt.s32.totalorder %s18, 2
      // Predicated region
      $region29: #{tpu_custom_call.1} parent=5 // pred_check
        %p227 = pneg %p226
      $region30: #{tpu_custom_call.1} parent=5 // pred_check_branch
        %229 = sbr.rel (%p227) target = $region32
      $region31: #{tpu_custom_call.1} parent=5 // pred_region
        // Predicated region
        $region33: #{tpu_custom_call.1} parent=31 // pred_check
          %p230 = pneg %p52
        $region34: #{tpu_custom_call.1} parent=31 // pred_check_branch
          %232 = sbr.rel (%p230) target = $region36
        $region35: #{tpu_custom_call.1} parent=31 // pred_region
          %s233 = sand.u32 %s42, 1
          %s234 = scalar_lea.sflag [#allocation4], %s233
          %s235 = sand.u32 %s42, 1
          %s236 = smul.addr %s235, 32
          %s237 = scalar_lea.vmem [#allocation3], %s236
          %s238 = smul.u32 4, %s26
          %s240 = ssub.s32 512, 512
          %241 = vsyncadd %s234, %s240
          %s242 = sadd.s32 %s25, %s238
          %s243 = smul.addr %s242, 128
          %s244 = scalar_lea.hbm %s0, %s243
          %s245 = sshll.u32 %s237, 4
          %s246 = int_to_ptr.vmem [resolvable:$true] %s245
          %251 = dma.hbm_to_vmem [thread:$0]  %s244, 512, %s246, %s234, 128, 128, 8
        $region36: #{tpu_custom_call.1} parent=31 // pred_fallthru
          _
      $region32: #{tpu_custom_call.1} parent=5 // pred_fallthru
        _
      %p252 = scmp.le.s32.totalorder 1, %s18
      %p253 = scmp.lt.s32.totalorder %s18, 3
      %p254 = pnand %p252, %p253
      %p255 = pneg %p254
      // Predicated region
      $region37: #{tpu_custom_call.1} parent=5 // pred_check
        _
      $region38: #{tpu_custom_call.1} parent=5 // pred_check_branch
        %257 = sbr.rel (%p254) target = $region40
      $region39: #{tpu_custom_call.1} parent=5 // pred_region
        %s258 = ssub.s32 %s18, 1
        %s259 = sand.u32 %s45, 1
        %s260 = scalar_lea.sflag [#allocation4], %s259
        %s261 = sand.u32 %s45, 1
        %s262 = smul.addr %s261, 32
        %s263 = scalar_lea.vmem [#allocation3], %s262
        // Predicated region
        $region41: #{tpu_custom_call.1} parent=39 // pred_check
          %p264 = pneg %p58
        $region42: #{tpu_custom_call.1} parent=39 // pred_check_branch
          %266 = sbr.rel (%p264) target = $region44
        $region43: #{tpu_custom_call.1} parent=39 // pred_region
          %267 = dma.done %s260, 512
        $region44: #{tpu_custom_call.1} parent=39 // pred_fallthru
          _
        // Predicated region
        $region45: #{tpu_custom_call.1} parent=39 // pred_check
          %p268 = pneg %p79
        $region46: #{tpu_custom_call.1} parent=39 // pred_check_branch
          %270 = sbr.rel (%p268) target = $region48
        $region47: #{tpu_custom_call.1} parent=39 // pred_region
          %271 = dma.done [#allocation7], 2048
        $region48: #{tpu_custom_call.1} parent=39 // pred_fallthru
          _
        // Predicated region
        $region49: #{tpu_custom_call.1} parent=39 // pred_check
          %p272 = pneg %p147
        $region50: #{tpu_custom_call.1} parent=39 // pred_check_branch
          %274 = sbr.rel (%p272) target = $region52
        $region51: #{tpu_custom_call.1} parent=39 // pred_region
          %275 = dma.done [#allocation7], 2048
        $region52: #{tpu_custom_call.1} parent=39 // pred_fallthru
          _
        %s276 = sand.u32 %s45, 1
        %s277 = scalar_lea.sflag [#allocation4], %s276
        %s278 = sand.u32 %s45, 1
        %s279 = smul.addr %s278, 32
        %s280 = scalar_lea.vmem [#allocation3], %s279
        %p281 = pneg %p58
        %p282 = pneg %p55
        %p283 = pneg %p79
        %p284 = pneg %p76
        %p285 = pneg %p100
        %p286 = pneg %p97
        %p287 = scmp.lt.s32.totalorder %s27, 0
        %s288 = scalar_select %p287, %s27, 0
        %s289 = smul.addr %s288, 8
        %s290 = scalar_lea.vmem %s3, %s289
        %p291 = pneg %p126
        %p292 = pneg %p123
        %p293 = pneg %p147
        %p294 = pneg %p144
        %p295 = pneg %p175
        %p296 = pneg %p172
        %s297 = sand.u32 %s162, 1
        %s298 = scalar_lea.sflag [#allocation5], %s297
        %s299 = sand.u32 %s162, 1
        %s300 = smul.addr %s299, 32
        %s301 = scalar_lea.vmem [#allocation9], %s300
        %s302 = smul.u32 4, %s28
        %p303 = scmp.lt.s32.totalorder %s27, 0
        %s304 = scalar_select %p303, %s27, 0
        %s305 = smul.addr %s304, 8
        %s306 = scalar_lea.vmem %s3, %s305
        %s307 = smul.u32 4, %s28
        %p308 = scmp.eq.s32.totalorder %s28, 0
        // Predicated region
        $region53: #{tpu_custom_call.1} parent=39 // pred_check
          %p309 = pneg %p308
        $region54: #{tpu_custom_call.1} parent=39 // pred_check_branch
          %311 = sbr.rel (%p309) target = $region56
        $region55: #{tpu_custom_call.1} parent=39 // pred_region
          %v312 = vld [vmem:[%s306] sm:$0xff]
          %313 = vst [vmem:[#allocation2] sm:$0xff] %v312
        $region56: #{tpu_custom_call.1} parent=39 // pred_fallthru
          _
        %v314 = vld [vmem:[%s263] sm:$0xff]
        %v315 = vld [vmem:[%s263 + $0x8] sm:$0xff]
        %v316 = vld [vmem:[%s263 + $0x10] sm:$0xff]
        %v317 = vld [vmem:[%s263 + $0x18] sm:$0xff]
        %v318 = vld [vmem:[#allocation6] sm:$0xff]
        %v319 = vld [vmem:[#allocation6 + $0x8] sm:$0xff]
        %v320 = vld [vmem:[#allocation6 + $0x10] sm:$0xff]
        %v321 = vld [vmem:[#allocation6 + $0x18] sm:$0xff]
        %v322 = vld [vmem:[#allocation6 + $0x20] sm:$0xff]
        %v323 = vld [vmem:[#allocation6 + $0x28] sm:$0xff]
        %v324 = vld [vmem:[#allocation6 + $0x30] sm:$0xff]
        %v325 = vld [vmem:[#allocation6 + $0x38] sm:$0xff]
        %v326 = vld [vmem:[#allocation6 + $0x40] sm:$0xff]
        %v327 = vld [vmem:[#allocation6 + $0x48] sm:$0xff]
        %v328 = vld [vmem:[#allocation6 + $0x50] sm:$0xff]
        %v329 = vld [vmem:[#allocation6 + $0x58] sm:$0xff]
        %v330 = vld [vmem:[#allocation6 + $0x60] sm:$0xff]
        %v331 = vld [vmem:[#allocation6 + $0x68] sm:$0xff]
        %v332 = vld [vmem:[#allocation6 + $0x70] sm:$0xff]
        %v333 = vld [vmem:[#allocation6 + $0x78] sm:$0xff]
        %v334 = vld [vmem:[%s2] sm:$0x1]
        %v336 = vlaneseq
        %v337 = vshrl.u32 %v336, 7
        %v338 = vsub.s32 0, %v337
        %v339 = vrot.slane %v334, %v338
        %341 = vmatprep.subr.mxu0 0.0
        %342 = vmatpush1.msra.mxu0 %v318
        %343 = vmatprep.subr.mxu0 0.0
        %344 = vmatpush1.msra.mxu0 %v319
        %345 = vmatprep.subr.mxu0 0.0
        %346 = vmatpush1.msra.mxu0 %v320
        %347 = vmatprep.subr.mxu0 0.0
        %348 = vmatpush1.msra.mxu0 %v321
        %349 = vmatprep.subr.mxu0 0.0
        %350 = vmatpush1.msra.mxu0 %v322
        %351 = vmatprep.subr.mxu0 0.0
        %352 = vmatpush1.msra.mxu0 %v323
        %353 = vmatprep.subr.mxu0 0.0
        %354 = vmatpush1.msra.mxu0 %v324
        %355 = vmatprep.subr.mxu0 0.0
        %356 = vmatpush1.msra.mxu0 %v325
        %357 = vmatprep.subr.mxu0 0.0
        %358 = vmatpush1.msra.mxu0 %v326
        %359 = vmatprep.subr.mxu0 0.0
        %360 = vmatpush1.msra.mxu0 %v327
        %361 = vmatprep.subr.mxu0 0.0
        %362 = vmatpush1.msra.mxu0 %v328
        %363 = vmatprep.subr.mxu0 0.0
        %364 = vmatpush1.msra.mxu0 %v329
        %365 = vmatprep.subr.mxu0 0.0
        %366 = vmatpush1.msra.mxu0 %v330
        %367 = vmatprep.subr.mxu0 0.0
        %368 = vmatpush1.msra.mxu0 %v331
        %369 = vmatprep.subr.mxu0 0.0
        %370 = vmatpush1.msra.mxu0 %v332
        %371 = vmatprep.subr.mxu0 0.0
        %372 = vmatpush1.msra.mxu0 %v333
        %373 = vmatprep.subr.mxu0 0.0
        %374 = vmatpush1.msra.mxu0 0.0
        %375 = vmatprep.subr.mxu0 0.0
        %376 = vmatpush1.msra.mxu0 0.0
        %377 = vmatprep.subr.mxu0 0.0
        %378 = vmatpush1.msra.mxu0 0.0
        %379 = vmatprep.subr.mxu0 0.0
        %380 = vmatpush1.msra.mxu0 0.0
        %381 = vmatprep.subr.mxu0 0.0
        %382 = vmatpush1.msra.mxu0 0.0
        %383 = vmatprep.subr.mxu0 0.0
        %384 = vmatpush1.msra.mxu0 0.0
        %385 = vmatprep.subr.mxu0 0.0
        %386 = vmatpush1.msra.mxu0 0.0
        %387 = vmatprep.subr.mxu0 0.0
        %388 = vmatpush1.msra.mxu0 0.0
        %389 = vmatprep.subr.mxu0 0.0
        %390 = vmatpush1.msra.mxu0 0.0
        %391 = vmatprep.subr.mxu0 0.0
        %392 = vmatpush1.msra.mxu0 0.0
        %393 = vmatprep.subr.mxu0 0.0
        %394 = vmatpush1.msra.mxu0 0.0
        %395 = vmatprep.subr.mxu0 0.0
        %396 = vmatpush1.msra.mxu0 0.0
        %397 = vmatprep.subr.mxu0 0.0
        %398 = vmatpush1.msra.mxu0 0.0
        %399 = vmatprep.subr.mxu0 0.0
        %400 = vmatpush1.msra.mxu0 0.0
        %401 = vmatprep.subr.mxu0 0.0
        %402 = vmatpush1.msra.mxu0 0.0
        %403 = vmatprep.subr.mxu0 0.0
        %404 = vmatpush1.msra.mxu0 0.0
        %405 = vmatprep.mubr.f32.mxu0 0.0
        %406 = vmatmul.mubr.f32.gmra.mrb[0].mxu0 %v314
        %v407 = vpop.f32.mrb[0].mxu0
        %v408 = vadd.f32 %v339, %v407
        %v409 = vpop.f32.mrb[0].mxu0
        %410 = vmatprep.mubr.f32.mxu0 0.0
        %411 = vmatmul.mubr.f32.gmra.mrb[0].mxu0 %v315
        %v412 = vpop.f32.mrb[0].mxu0
        %v413 = vadd.f32 %v339, %v412
        %v414 = vpop.f32.mrb[0].mxu0
        %415 = vmatprep.mubr.f32.mxu0 0.0
        %416 = vmatmul.mubr.f32.gmra.mrb[0].mxu0 %v316
        %v417 = vpop.f32.mrb[0].mxu0
        %v418 = vadd.f32 %v339, %v417
        %v419 = vpop.f32.mrb[0].mxu0
        %420 = vmatprep.mubr.f32.mxu0 0.0
        %421 = vmatmul.mubr.f32.gmra.mrb[0].mxu0 %v317
        %v422 = vpop.f32.mrb[0].mxu0
        %v423 = vadd.f32 %v339, %v422
        %v424 = vpop.f32.mrb[0].mxu0
        %425 = vdwg.mxu0
        %426 = vst [vmem:[%s301] sm:$0xff] %v408
        %427 = vst [vmem:[%s301 + $0x8] sm:$0xff] %v413
        %428 = vst [vmem:[%s301 + $0x10] sm:$0xff] %v418
        %429 = vst [vmem:[%s301 + $0x18] sm:$0xff] %v423
        %v430 = vld [vmem:[#allocation8] sm:$0xff]
        %v431 = vld [vmem:[#allocation8 + $0x8] sm:$0xff]
        %v432 = vld [vmem:[#allocation8 + $0x10] sm:$0xff]
        %v433 = vld [vmem:[#allocation8 + $0x18] sm:$0xff]
        %v434 = vld [vmem:[#allocation8 + $0x20] sm:$0xff]
        %v435 = vld [vmem:[#allocation8 + $0x28] sm:$0xff]
        %v436 = vld [vmem:[#allocation8 + $0x30] sm:$0xff]
        %v437 = vld [vmem:[#allocation8 + $0x38] sm:$0xff]
        %v438 = vld [vmem:[#allocation8 + $0x40] sm:$0xff]
        %v439 = vld [vmem:[#allocation8 + $0x48] sm:$0xff]
        %v440 = vld [vmem:[#allocation8 + $0x50] sm:$0xff]
        %v441 = vld [vmem:[#allocation8 + $0x58] sm:$0xff]
        %v442 = vld [vmem:[#allocation8 + $0x60] sm:$0xff]
        %v443 = vld [vmem:[#allocation8 + $0x68] sm:$0xff]
        %v444 = vld [vmem:[#allocation8 + $0x70] sm:$0xff]
        %v445 = vld [vmem:[#allocation8 + $0x78] sm:$0xff]
        %v446 = vld [vmem:[#allocation2] sm:$0xff]
        %v447 = vld [vmem:[%s301] sm:$0xff]
        %448 = vmatprep.subr.mxu0 0.0
        %449 = vmatpush1.msra.mxu0 %v430
        %450 = vmatprep.subr.mxu0 0.0
        %451 = vmatpush1.msra.mxu0 %v431
        %452 = vmatprep.subr.mxu0 0.0
        %453 = vmatpush1.msra.mxu0 %v432
        %454 = vmatprep.subr.mxu0 0.0
        %455 = vmatpush1.msra.mxu0 %v433
        %456 = vmatprep.subr.mxu0 0.0
        %457 = vmatpush1.msra.mxu0 %v434
        %458 = vmatprep.subr.mxu0 0.0
        %459 = vmatpush1.msra.mxu0 %v435
        %460 = vmatprep.subr.mxu0 0.0
        %461 = vmatpush1.msra.mxu0 %v436
        %462 = vmatprep.subr.mxu0 0.0
        %463 = vmatpush1.msra.mxu0 %v437
        %464 = vmatprep.subr.mxu0 0.0
        %465 = vmatpush1.msra.mxu0 %v438
        %466 = vmatprep.subr.mxu0 0.0
        %467 = vmatpush1.msra.mxu0 %v439
        %468 = vmatprep.subr.mxu0 0.0
        %469 = vmatpush1.msra.mxu0 %v440
        %470 = vmatprep.subr.mxu0 0.0
        %471 = vmatpush1.msra.mxu0 %v441
        %472 = vmatprep.subr.mxu0 0.0
        %473 = vmatpush1.msra.mxu0 %v442
        %474 = vmatprep.subr.mxu0 0.0
        %475 = vmatpush1.msra.mxu0 %v443
        %476 = vmatprep.subr.mxu0 0.0
        %477 = vmatpush1.msra.mxu0 %v444
        %478 = vmatprep.subr.mxu0 0.0
        %479 = vmatpush1.msra.mxu0 %v445
        %480 = vmatprep.subr.mxu0 0.0
        %481 = vmatpush1.msra.mxu0 0.0
        %482 = vmatprep.subr.mxu0 0.0
        %483 = vmatpush1.msra.mxu0 0.0
        %484 = vmatprep.subr.mxu0 0.0
        %485 = vmatpush1.msra.mxu0 0.0
        %486 = vmatprep.subr.mxu0 0.0
        %487 = vmatpush1.msra.mxu0 0.0
        %488 = vmatprep.subr.mxu0 0.0
        %489 = vmatpush1.msra.mxu0 0.0
        %490 = vmatprep.subr.mxu0 0.0
        %491 = vmatpush1.msra.mxu0 0.0
        %492 = vmatprep.subr.mxu0 0.0
        %493 = vmatpush1.msra.mxu0 0.0
        %494 = vmatprep.subr.mxu0 0.0
        %495 = vmatpush1.msra.mxu0 0.0
        %496 = vmatprep.subr.mxu0 0.0
        %497 = vmatpush1.msra.mxu0 0.0
        %498 = vmatprep.subr.mxu0 0.0
        %499 = vmatpush1.msra.mxu0 0.0
        %500 = vmatprep.subr.mxu0 0.0
        %501 = vmatpush1.msra.mxu0 0.0
        %502 = vmatprep.subr.mxu0 0.0
        %503 = vmatpush1.msra.mxu0 0.0
        %504 = vmatprep.subr.mxu0 0.0
        %505 = vmatpush1.msra.mxu0 0.0
        %506 = vmatprep.subr.mxu0 0.0
        %507 = vmatpush1.msra.mxu0 0.0
        %508 = vmatprep.subr.mxu0 0.0
        %509 = vmatpush1.msra.mxu0 0.0
        %510 = vmatprep.subr.mxu0 0.0
        %511 = vmatpush1.msra.mxu0 0.0
        %512 = vmatprep.mubr.f32.mxu0 0.0
        %513 = vmatmul.mubr.f32.gmra.mrb[0].mxu0 %v446
        %v514 = vpop.f32.mrb[0].mxu0
        %v515 = vadd.f32 0.0, %v514
        %v516 = vpop.f32.mrb[0].mxu0
        %517 = vdwg.mxu0
        %v518 = vadd.f32 %v447, %v515
        %v519 = vtanh.pop %v518
        %520 = vst [vmem:[%s301] sm:$0xff] %v519
        %s521 = scalar_lea.vmem %s301, 8 [#allocation9]
        %v522 = vld [vmem:[%s521] sm:$0xff]
        %523 = vmatprep.subr.mxu0 0.0
        %524 = vmatpush1.msra.mxu0 %v430
        %525 = vmatprep.subr.mxu0 0.0
        %526 = vmatpush1.msra.mxu0 %v431
        %527 = vmatprep.subr.mxu0 0.0
        %528 = vmatpush1.msra.mxu0 %v432
        %529 = vmatprep.subr.mxu0 0.0
        %530 = vmatpush1.msra.mxu0 %v433
        %531 = vmatprep.subr.mxu0 0.0
        %532 = vmatpush1.msra.mxu0 %v434
        %533 = vmatprep.subr.mxu0 0.0
        %534 = vmatpush1.msra.mxu0 %v435
        %535 = vmatprep.subr.mxu0 0.0
        %536 = vmatpush1.msra.mxu0 %v436
        %537 = vmatprep.subr.mxu0 0.0
        %538 = vmatpush1.msra.mxu0 %v437
        %539 = vmatprep.subr.mxu0 0.0
        %540 = vmatpush1.msra.mxu0 %v438
        %541 = vmatprep.subr.mxu0 0.0
        %542 = vmatpush1.msra.mxu0 %v439
        %543 = vmatprep.subr.mxu0 0.0
        %544 = vmatpush1.msra.mxu0 %v440
        %545 = vmatprep.subr.mxu0 0.0
        %546 = vmatpush1.msra.mxu0 %v441
        %547 = vmatprep.subr.mxu0 0.0
        %548 = vmatpush1.msra.mxu0 %v442
        %549 = vmatprep.subr.mxu0 0.0
        %550 = vmatpush1.msra.mxu0 %v443
        %551 = vmatprep.subr.mxu0 0.0
        %552 = vmatpush1.msra.mxu0 %v444
        %553 = vmatprep.subr.mxu0 0.0
        %554 = vmatpush1.msra.mxu0 %v445
        %555 = vmatprep.subr.mxu0 0.0
        %556 = vmatpush1.msra.mxu0 0.0
        %557 = vmatprep.subr.mxu0 0.0
        %558 = vmatpush1.msra.mxu0 0.0
        %559 = vmatprep.subr.mxu0 0.0
        %560 = vmatpush1.msra.mxu0 0.0
        %561 = vmatprep.subr.mxu0 0.0
        %562 = vmatpush1.msra.mxu0 0.0
        %563 = vmatprep.subr.mxu0 0.0
        %564 = vmatpush1.msra.mxu0 0.0
        %565 = vmatprep.subr.mxu0 0.0
        %566 = vmatpush1.msra.mxu0 0.0
        %567 = vmatprep.subr.mxu0 0.0
        %568 = vmatpush1.msra.mxu0 0.0
        %569 = vmatprep.subr.mxu0 0.0
        %570 = vmatpush1.msra.mxu0 0.0
        %571 = vmatprep.subr.mxu0 0.0
        %572 = vmatpush1.msra.mxu0 0.0
        %573 = vmatprep.subr.mxu0 0.0
        %574 = vmatpush1.msra.mxu0 0.0
        %575 = vmatprep.subr.mxu0 0.0
        %576 = vmatpush1.msra.mxu0 0.0
        %577 = vmatprep.subr.mxu0 0.0
        %578 = vmatpush1.msra.mxu0 0.0
        %579 = vmatprep.subr.mxu0 0.0
        %580 = vmatpush1.msra.mxu0 0.0
        %581 = vmatprep.subr.mxu0 0.0
        %582 = vmatpush1.msra.mxu0 0.0
        %583 = vmatprep.subr.mxu0 0.0
        %584 = vmatpush1.msra.mxu0 0.0
        %585 = vmatprep.subr.mxu0 0.0
        %586 = vmatpush1.msra.mxu0 0.0
        %587 = vmatprep.mubr.f32.mxu0 0.0
        %588 = vmatmul.mubr.f32.gmra.mrb[0].mxu0 %v519
        %v589 = vpop.f32.mrb[0].mxu0
        %v590 = vadd.f32 0.0, %v589
        %v591 = vpop.f32.mrb[0].mxu0
        %592 = vdwg.mxu0
        %v593 = vadd.f32 %v522, %v590
        %v594 = vtanh.pop %v593
        %595 = vst [vmem:[%s521] sm:$0xff] %v594
        %s596 = scalar_lea.vmem %s301, 16 [#allocation9]
        %v597 = vld [vmem:[%s596] sm:$0xff]
        %598 = vmatprep.subr.mxu0 0.0
        %599 = vmatpush1.msra.mxu0 %v430
        %600 = vmatprep.subr.mxu0 0.0
        %601 = vmatpush1.msra.mxu0 %v431
        %602 = vmatprep.subr.mxu0 0.0
        %603 = vmatpush1.msra.mxu0 %v432
        %604 = vmatprep.subr.mxu0 0.0
        %605 = vmatpush1.msra.mxu0 %v433
        %606 = vmatprep.subr.mxu0 0.0
        %607 = vmatpush1.msra.mxu0 %v434
        %608 = vmatprep.subr.mxu0 0.0
        %609 = vmatpush1.msra.mxu0 %v435
        %610 = vmatprep.subr.mxu0 0.0
        %611 = vmatpush1.msra.mxu0 %v436
        %612 = vmatprep.subr.mxu0 0.0
        %613 = vmatpush1.msra.mxu0 %v437
        %614 = vmatprep.subr.mxu0 0.0
        %615 = vmatpush1.msra.mxu0 %v438
        %616 = vmatprep.subr.mxu0 0.0
        %617 = vmatpush1.msra.mxu0 %v439
        %618 = vmatprep.subr.mxu0 0.0
        %619 = vmatpush1.msra.mxu0 %v440
        %620 = vmatprep.subr.mxu0 0.0
        %621 = vmatpush1.msra.mxu0 %v441
        %622 = vmatprep.subr.mxu0 0.0
        %623 = vmatpush1.msra.mxu0 %v442
        %624 = vmatprep.subr.mxu0 0.0
        %625 = vmatpush1.msra.mxu0 %v443
        %626 = vmatprep.subr.mxu0 0.0
        %627 = vmatpush1.msra.mxu0 %v444
        %628 = vmatprep.subr.mxu0 0.0
        %629 = vmatpush1.msra.mxu0 %v445
        %630 = vmatprep.subr.mxu0 0.0
        %631 = vmatpush1.msra.mxu0 0.0
        %632 = vmatprep.subr.mxu0 0.0
        %633 = vmatpush1.msra.mxu0 0.0
        %634 = vmatprep.subr.mxu0 0.0
        %635 = vmatpush1.msra.mxu0 0.0
        %636 = vmatprep.subr.mxu0 0.0
        %637 = vmatpush1.msra.mxu0 0.0
        %638 = vmatprep.subr.mxu0 0.0
        %639 = vmatpush1.msra.mxu0 0.0
        %640 = vmatprep.subr.mxu0 0.0
        %641 = vmatpush1.msra.mxu0 0.0
        %642 = vmatprep.subr.mxu0 0.0
        %643 = vmatpush1.msra.mxu0 0.0
        %644 = vmatprep.subr.mxu0 0.0
        %645 = vmatpush1.msra.mxu0 0.0
        %646 = vmatprep.subr.mxu0 0.0
        %647 = vmatpush1.msra.mxu0 0.0
        %648 = vmatprep.subr.mxu0 0.0
        %649 = vmatpush1.msra.mxu0 0.0
        %650 = vmatprep.subr.mxu0 0.0
        %651 = vmatpush1.msra.mxu0 0.0
        %652 = vmatprep.subr.mxu0 0.0
        %653 = vmatpush1.msra.mxu0 0.0
        %654 = vmatprep.subr.mxu0 0.0
        %655 = vmatpush1.msra.mxu0 0.0
        %656 = vmatprep.subr.mxu0 0.0
        %657 = vmatpush1.msra.mxu0 0.0
        %658 = vmatprep.subr.mxu0 0.0
        %659 = vmatpush1.msra.mxu0 0.0
        %660 = vmatprep.subr.mxu0 0.0
        %661 = vmatpush1.msra.mxu0 0.0
        %662 = vmatprep.mubr.f32.mxu0 0.0
        %663 = vmatmul.mubr.f32.gmra.mrb[0].mxu0 %v594
        %v664 = vpop.f32.mrb[0].mxu0
        %v665 = vadd.f32 0.0, %v664
        %v666 = vpop.f32.mrb[0].mxu0
        %667 = vdwg.mxu0
        %v668 = vadd.f32 %v597, %v665
        %v669 = vtanh.pop %v668
        %670 = vst [vmem:[%s596] sm:$0xff] %v669
        %s671 = scalar_lea.vmem %s301, 24 [#allocation9]
        %v672 = vld [vmem:[%s671] sm:$0xff]
        %673 = vmatprep.subr.mxu0 0.0
        %674 = vmatpush1.msra.mxu0 %v430
        %675 = vmatprep.subr.mxu0 0.0
        %676 = vmatpush1.msra.mxu0 %v431
        %677 = vmatprep.subr.mxu0 0.0
        %678 = vmatpush1.msra.mxu0 %v432
        %679 = vmatprep.subr.mxu0 0.0
        %680 = vmatpush1.msra.mxu0 %v433
        %681 = vmatprep.subr.mxu0 0.0
        %682 = vmatpush1.msra.mxu0 %v434
        %683 = vmatprep.subr.mxu0 0.0
        %684 = vmatpush1.msra.mxu0 %v435
        %685 = vmatprep.subr.mxu0 0.0
        %686 = vmatpush1.msra.mxu0 %v436
        %687 = vmatprep.subr.mxu0 0.0
        %688 = vmatpush1.msra.mxu0 %v437
        %689 = vmatprep.subr.mxu0 0.0
        %690 = vmatpush1.msra.mxu0 %v438
        %691 = vmatprep.subr.mxu0 0.0
        %692 = vmatpush1.msra.mxu0 %v439
        %693 = vmatprep.subr.mxu0 0.0
        %694 = vmatpush1.msra.mxu0 %v440
        %695 = vmatprep.subr.mxu0 0.0
        %696 = vmatpush1.msra.mxu0 %v441
        %697 = vmatprep.subr.mxu0 0.0
        %698 = vmatpush1.msra.mxu0 %v442
        %699 = vmatprep.subr.mxu0 0.0
        %700 = vmatpush1.msra.mxu0 %v443
        %701 = vmatprep.subr.mxu0 0.0
        %702 = vmatpush1.msra.mxu0 %v444
        %703 = vmatprep.subr.mxu0 0.0
        %704 = vmatpush1.msra.mxu0 %v445
        %705 = vmatprep.subr.mxu0 0.0
        %706 = vmatpush1.msra.mxu0 0.0
        %707 = vmatprep.subr.mxu0 0.0
        %708 = vmatpush1.msra.mxu0 0.0
        %709 = vmatprep.subr.mxu0 0.0
        %710 = vmatpush1.msra.mxu0 0.0
        %711 = vmatprep.subr.mxu0 0.0
        %712 = vmatpush1.msra.mxu0 0.0
        %713 = vmatprep.subr.mxu0 0.0
        %714 = vmatpush1.msra.mxu0 0.0
        %715 = vmatprep.subr.mxu0 0.0
        %716 = vmatpush1.msra.mxu0 0.0
        %717 = vmatprep.subr.mxu0 0.0
        %718 = vmatpush1.msra.mxu0 0.0
        %719 = vmatprep.subr.mxu0 0.0
        %720 = vmatpush1.msra.mxu0 0.0
        %721 = vmatprep.subr.mxu0 0.0
        %722 = vmatpush1.msra.mxu0 0.0
        %723 = vmatprep.subr.mxu0 0.0
        %724 = vmatpush1.msra.mxu0 0.0
        %725 = vmatprep.subr.mxu0 0.0
        %726 = vmatpush1.msra.mxu0 0.0
        %727 = vmatprep.subr.mxu0 0.0
        %728 = vmatpush1.msra.mxu0 0.0
        %729 = vmatprep.subr.mxu0 0.0
        %730 = vmatpush1.msra.mxu0 0.0
        %731 = vmatprep.subr.mxu0 0.0
        %732 = vmatpush1.msra.mxu0 0.0
        %733 = vmatprep.subr.mxu0 0.0
        %734 = vmatpush1.msra.mxu0 0.0
        %735 = vmatprep.subr.mxu0 0.0
        %736 = vmatpush1.msra.mxu0 0.0
        %737 = vmatprep.mubr.f32.mxu0 0.0
        %738 = vmatmul.mubr.f32.gmra.mrb[0].mxu0 %v669
        %v739 = vpop.f32.mrb[0].mxu0
        %v740 = vadd.f32 0.0, %v739
        %v741 = vpop.f32.mrb[0].mxu0
        %742 = vdwg.mxu0
        %v743 = vadd.f32 %v672, %v740
        %v744 = vtanh.pop %v743
        %745 = vst [vmem:[%s671] sm:$0xff] %v744
        %746 = vst [vmem:[#allocation2] sm:$0xff] %v744
        %s747 = sand.u32 %s162, 1
        %s748 = scalar_lea.sflag [#allocation5], %s747
        %s749 = sand.u32 %s162, 1
        %s750 = smul.addr %s749, 32
        %s751 = scalar_lea.vmem [#allocation9], %s750
        // Predicated region
        $region57: #{tpu_custom_call.1} parent=39 // pred_check
          %p752 = pneg %p172
        $region58: #{tpu_custom_call.1} parent=39 // pred_check_branch
          %754 = sbr.rel (%p752) target = $region60
        $region59: #{tpu_custom_call.1} parent=39 // pred_region
          %s755 = smul.u32 4, %s28
          %s757 = ssub.s32 512, 512
          %758 = vsyncadd %s748, %s757
          %s759 = sadd.s32 %s27, %s755
          %s760 = smul.addr %s759, 128
          %s761 = scalar_lea.hbm %s5, %s760
          %s762 = sshll.u32 %s751, 4
          %s763 = int_to_ptr.vmem [resolvable:$true] %s762
          %768 = dma.vmem_to_hbm [thread:$0]  %s763, 512, %s761, %s748, 128, 128, 8
        $region60: #{tpu_custom_call.1} parent=39 // pred_fallthru
          _
      $region40: #{tpu_custom_call.1} parent=5 // pred_fallthru
        _
      %p769 = scmp.le.s32.totalorder 2, %s18
      // Predicated region
      $region61: #{tpu_custom_call.1} parent=5 // pred_check
        %p770 = pneg %p769
      $region62: #{tpu_custom_call.1} parent=5 // pred_check_branch
        %772 = sbr.rel (%p770) target = $region64
      $region63: #{tpu_custom_call.1} parent=5 // pred_region
        %s773 = ssub.s32 %s18, 2
        // Predicated region
        $region65: #{tpu_custom_call.1} parent=63 // pred_check
          %p774 = pneg %p178
        $region66: #{tpu_custom_call.1} parent=63 // pred_check_branch
          %776 = sbr.rel (%p774) target = $region68
        $region67: #{tpu_custom_call.1} parent=63 // pred_region
          %s777 = sand.u32 %s163, 1
          %s778 = scalar_lea.sflag [#allocation5], %s777
          %s779 = sand.u32 %s163, 1
          %s780 = smul.addr %s779, 32
          %s781 = scalar_lea.vmem [#allocation9], %s780
          %782 = dma.done %s778, 512
        $region68: #{tpu_custom_call.1} parent=63 // pred_fallthru
          _
      $region64: #{tpu_custom_call.1} parent=5 // pred_fallthru
        _
    $region6: #{tpu_custom_call.1} parent=1 // loop_footer
      %s22 = sadd.s32 1, %s18
    $region7: #{tpu_custom_call.1} parent=1 // loop_footer_branch
      %17 = sbr.rel target = $region3
    $region8: #{tpu_custom_call.1} parent=1 // loop_exit
      _
    %783 = vsyncpa [#allocation4], 1
    %s784 = scalar_lea.sflag [#allocation4], 1
    %785 = vsyncpa %s784, 1
    %786 = vsyncpa [#allocation7], 1
    %787 = vsyncpa [#allocation5], 1
    %s788 = scalar_lea.sflag [#allocation5], 1
    %789 = vsyncpa %s788, 1

</llo_original>
